<compile_context>
chip_gen: v7x
topology: tpu7x:2x2x1
jax: 0.10.0
libtpu: 0.0.40
codegen_flags: <defaults>
</compile_context>

<pallas_src>
import functools

import jax
import jax.numpy as jnp
from jax.experimental import pallas as pl
from jax.experimental.pallas import tpu as pltpu


def _round_up(x, m):
    return ((x + m - 1) // m) * m


def _vmem_limit_bytes():
    """~65% of physical VMEM (v7x: ~41 MiB of 64; v5e/v6e: ~83 MiB of 128)."""
    cap = None
    try:
        cap = int(getattr(pltpu.get_tpu_info(), "vmem_capacity_bytes", 0)) or None
    except Exception:
        cap = None
    if cap is None:
        cap = 64 * 1024 * 1024          # conservative (v7x-sized) fallback
    return max(32 * 1024 * 1024, min(int(cap * 0.65), 100 * 1024 * 1024))


def _conv_bn_relu_kernel(x_ref, w_ref, shift_ref, o_ref, *,
                         kh_taps, stride, toh, owp, r_rows, msub, n_sub):
    """One (batch, cout-block, row-tile) grid step.

    x_ref:     (1, S, HQ*OWP, KC)  bf16 residue-grouped, KW-folded activation
                                   slab for this batch (resident across j, t).
    w_ref:     (KH, KC, CB)        bf16 weights, BN scale pre-folded.
    shift_ref: (1, CB)             f32 folded bias / BN shift.
    o_ref:     (1, TOH*OWP, CB)
    """
    t = pl.program_id(2)
    row0 = t * toh
    shift = shift_ref[...]                          # hoisted (1, CB) load

    for i in range(n_sub):                          # static, small unroll
        base = row0 + i * r_rows
        acc = None
        for kh in range(kh_taps):
            # Contiguous, 8-aligned slice (owp is a multiple of 8); the
            # residue grouping in the wrapper removed the H-stride.
            start = pl.multiple_of((base + kh // stride) * owp, 8)
            patch = x_ref[0, kh % stride, pl.ds(start, msub), :]
            part = jnp.dot(patch, w_ref[kh],
                           preferred_element_type=jnp.float32)
            acc = part if acc is None else acc + part
        y = jnp.maximum(acc + shift, 0.0)
        o_ref[0, i * msub:(i + 1) * msub, :] = y.astype(o_ref.dtype)


def basic_conv2d(x_nchw, weight_oihw, bias, *, stride=1, padding=0,
                 norm=False, bn_weight=None, bn_bias=None,
                 bn_running_mean=None, bn_running_var=None, eps=1e-5,
                 block_rows=None, out_dtype=None):
    """Forward of BasicConv2d.  Input/Output are NCHW like PyTorch."""
    N, Cin, H, W = x_nchw.shape
    Cout, _, KH, KW = weight_oihw.shape
    s = int(stride)
    OH = (H + 2 * padding - KH) // s + 1
    OW = (W + 2 * padding - KW) // s + 1
    out_dtype = out_dtype or x_nchw.dtype

    # ---------------- tiling choices (padding, not divisor constraints) -----
    OWp = _round_up(OW, 8)                          # lane/sublane-friendly width
    if Cout <= 256:                                 # lane-dense Cout blocks
        Cp = max(128, _round_up(Cout, 128))
        cb = Cp
    else:                                           # 256-wide blocks + grid axis
        cb = 256
        Cp = _round_up(Cout, 256)
    J = Cp // cb

    if block_rows is not None:
        toh = max(1, int(block_rows))
    else:
        toh = min(OH, max(1, 2048 // OWp))          # ~2048 out px per grid step
    # Inner sub-tile: keep the f32 accumulator ~<=128 KiB (vreg-friendly).
    r_rows = min(toh, max(1, -(-max(1, 32768 // cb) // OWp)))
    toh = _round_up(toh, r_rows)
    msub = r_rows * OWp
    n_sub = toh // r_rows
    T = -(-OH // toh)
    OHp = T * toh

    # ---------------- glue / layout plumbing (plain JAX) --------------------
    kc = KW * Cin
    Hq = OHp + (KH - 1) // s                        # rows per stride-residue
    Htot = Hq * s
    Wneed = (OWp - 1) * s + KW
    extra_h = max(0, Htot - (H + 2 * padding))
    extra_w = max(0, Wneed - (W + 2 * padding))

    x = jnp.transpose(x_nchw, (0, 2, 3, 1))         # NCHW -> NHWC
    x = jnp.pad(x, ((0, 0), (padding, padding + extra_h),
                    (padding, padding + extra_w), (0, 0)))
    x = x[:, :Htot, :, :].astype(jnp.bfloat16)      # MXU-native operand

    # Fold the KW taps and the W-stride into the channel axis:
    #   xf[n, h, ow, kw*Cin + c] = x_pad[n, h, ow*s + kw, c]
    xf = jnp.concatenate(
        [x[:, :, kw:kw + (OWp - 1) * s + 1:s, :] for kw in range(KW)],
        axis=-1)                                    # (N, Htot, OWp, kc)
    # Group rows by residue mod stride (pure layout; no duplication), then
    # flatten (rows, OWp) so in-kernel tap reads are flat aligned slices.
    xg = xf.reshape(N, Hq, s, OWp, kc).transpose(0, 2, 1, 3, 4)
    xg = xg.reshape(N, s, Hq * OWp, kc)             # (N, s, Hq*OWp, kc)

    # Weights OIHW -> (KH, KW*Cin, Cout); K ordering (kw, cin) matches xg.
    w = jnp.transpose(weight_oihw, (2, 3, 1, 0)).reshape(KH, kc, Cout)
    w = w.astype(jnp.float32)

    # Fold bias + eval-mode BatchNorm: scale into the weights, shift stays.
    # TODO(synk): training-mode BatchNorm (batch statistics + running-stat
    # updates) is not implemented; only eval-mode running stats are folded.
    if norm:
        inv_std = 1.0 / jnp.sqrt(bn_running_var.astype(jnp.float32) + eps)
        g = bn_weight.astype(jnp.float32) * inv_std
        shift = ((bias.astype(jnp.float32)
                  - bn_running_mean.astype(jnp.float32)) * g
                 + bn_bias.astype(jnp.float32))
    else:
        g = jnp.ones((Cout,), jnp.float32)
        shift = bias.astype(jnp.float32)
    w = jnp.pad(w * g[None, None, :],
                ((0, 0), (0, 0), (0, Cp - Cout))).astype(jnp.bfloat16)
    shift = jnp.pad(shift, (0, Cp - Cout)).reshape(1, Cp)

    # ---------------- pallas_call -------------------------------------------
    kernel = functools.partial(
        _conv_bn_relu_kernel, kh_taps=KH, stride=s, toh=toh, owp=OWp,
        r_rows=r_rows, msub=msub, n_sub=n_sub)

    flops = 2 * N * OH * OW * KH * KW * Cin * Cout
    bytes_accessed = int(xg.size * 2 + w.size * 2 + shift.size * 4
                         + N * OHp * OWp * Cp * jnp.dtype(out_dtype).itemsize)

    out_flat = pl.pallas_call(
        kernel,
        out_shape=jax.ShapeDtypeStruct((N, OHp * OWp, Cp), out_dtype),
        grid_spec=pltpu.PrefetchScalarGridSpec(
            num_scalar_prefetch=0,
            grid=(N, J, T),
            in_specs=[
                # Whole residue-grouped slab per batch; constant over (j, t)
                # -> stays VMEM-resident, DMA'd once per batch.
                pl.BlockSpec((1, s, Hq * OWp, kc),
                             lambda n, j, t: (n, 0, 0, 0)),
                pl.BlockSpec((KH, kc, cb), lambda n, j, t: (0, 0, j)),
                pl.BlockSpec((1, cb), lambda n, j, t: (0, j)),
            ],
            out_specs=pl.BlockSpec((1, toh * OWp, cb),
                                   lambda n, j, t: (n, t, j)),
        ),
        compiler_params=pltpu.CompilerParams(
            dimension_semantics=("parallel", "parallel", "parallel"),
            vmem_limit_bytes=_vmem_limit_bytes()),
        cost_estimate=pl.CostEstimate(flops=flops, transcendentals=0,
                                      bytes_accessed=bytes_accessed),
    )(xg, w, shift)

    out = out_flat.reshape(N, OHp, OWp, Cp)[:, :OH, :OW, :Cout]
    return jnp.transpose(out, (0, 3, 1, 2))         # NHWC -> NCHW


def _reference(x, w, b, *, stride, padding, norm, bn_w, bn_b, bn_m, bn_v,
               eps=1e-5):
    """Full-f32 reference (module semantics)."""
    y = jax.lax.conv_general_dilated(
        x.astype(jnp.float32), w.astype(jnp.float32),
        window_strides=(stride, stride),
        padding=[(padding, padding), (padding, padding)],
        dimension_numbers=("NCHW", "OIHW", "NCHW"))
    y = y + b.reshape(1, -1, 1, 1)
    if norm:
        y = (y - bn_m.reshape(1, -1, 1, 1)) / jnp.sqrt(
            bn_v.reshape(1, -1, 1, 1) + eps)
        y = y * bn_w.reshape(1, -1, 1, 1) + bn_b.reshape(1, -1, 1, 1)
    return jnp.maximum(y, 0.0)


if __name__ == "__main__":
    key = jax.random.PRNGKey(0)
    kx, kw_key, kb = jax.random.split(key, 3)

    # Small shapes consistent with the module: batch=2, in_channels=4,
    # spatial=16x16, out_channels=8, kernel_size=3.
    N, Cin, H, W = 2, 4, 16, 16
    Cout, K = 8, 3

    x = jax.random.normal(kx, (N, Cin, H, W), jnp.float32)

    fan_in = Cin * K * K
    bound = 1.0 / (fan_in ** 0.5)
    weight = jax.random.uniform(kw_key, (Cout, Cin, K, K), jnp.float32,
                                -bound, bound)
    bias = jax.random.uniform(kb, (Cout,), jnp.float32, -bound, bound)

    # BatchNorm2d init (PyTorch defaults): gamma=1, beta=0, mean=0, var=1.
    bn_w = jnp.ones((Cout,), jnp.float32)
    bn_b = jnp.zeros((Cout,), jnp.float32)
    bn_m = jnp.zeros((Cout,), jnp.float32)
    bn_v = jnp.ones((Cout,), jnp.float32)

    configs = [
        dict(stride=1, padding=1, norm=False, block_rows=None),  # single tile
        dict(stride=1, padding=1, norm=True, block_rows=5),      # padded remainder tiles
        dict(stride=2, padding=1, norm=True, block_rows=None),   # strided (residue) path
    ]
    for cfg in configs:
        out = basic_conv2d(
            x, weight, bias, stride=cfg["stride"], padding=cfg["padding"],
            norm=cfg["norm"], bn_weight=bn_w, bn_bias=bn_b,
            bn_running_mean=bn_m, bn_running_var=bn_v,
            block_rows=cfg["block_rows"])
        out = jax.block_until_ready(out)

        ref = _reference(x, weight, bias, stride=cfg["stride"],
                         padding=cfg["padding"], norm=cfg["norm"],
                         bn_w=bn_w, bn_b=bn_b, bn_m=bn_m, bn_v=bn_v)
        OH = (H + 2 * cfg["padding"] - K) // cfg["stride"] + 1
        OW = (W + 2 * cfg["padding"] - K) // cfg["stride"] + 1
        assert out.shape == (N, Cout, OH, OW), out.shape
        max_err = jnp.max(jnp.abs(out - ref))
        assert jnp.allclose(out, ref, atol=2e-2, rtol=2e-2), (
            f"mismatch {cfg}: max abs err {max_err}")

    print("KERNEL_OK")
</pallas_src>

<mosaic_0001>
module attributes {stable_mosaic.version = 11 : i64} {
  func.func @_conv_bn_relu_kernel(%arg0: i32, %arg1: i32, %arg2: i32, %arg3: memref<1x1x288x12xbf16, #tpu.memory_space<vmem>>, %arg4: memref<3x12x128xbf16, #tpu.memory_space<vmem>>, %arg5: memref<1x128xf32, #tpu.memory_space<vmem>>, %arg6: memref<1x256x128xf32, #tpu.memory_space<vmem>>) attributes {dimension_semantics = [#tpu.dimension_semantics<parallel>, #tpu.dimension_semantics<parallel>, #tpu.dimension_semantics<parallel>], iteration_bounds = array<i64: 2, 1, 1>, scalar_prefetch = 0 : i64, scratch_operands = 0 : i64, tpu.core_type = #tpu.core_type<tc>, window_params = [{transform_indices = @transform_0, window_bounds = array<i64: 1, 1, 288, 12>}, {transform_indices = @transform_1, window_bounds = array<i64: 3, 12, 128>}, {transform_indices = @transform_2, window_bounds = array<i64: 1, 128>}, {transform_indices = @transform_3, window_bounds = array<i64: 1, 256, 128>}]} {
    %c16_i32 = arith.constant 16 : i32
    %0 = arith.muli %arg2, %c16_i32 : i32
    %c0 = arith.constant 0 : index
    %c0_0 = arith.constant 0 : index
    %1 = vector.load %arg5[%c0, %c0_0] : memref<1x128xf32, #tpu.memory_space<vmem>>, vector<1x128xf32>
    %c0_i32 = arith.constant 0 : i32
    %2 = arith.addi %0, %c0_i32 : i32
    %c0_i32_1 = arith.constant 0 : i32
    %3 = arith.addi %2, %c0_i32_1 : i32
    %c16_i32_2 = arith.constant 16 : i32
    %4 = arith.muli %3, %c16_i32_2 : i32
    %5 = tpu.assume_multiple %4, 8 : i32
    %c0_3 = arith.constant 0 : index
    %c0_4 = arith.constant 0 : index
    %6 = arith.index_cast %5 : i32 to index
    %c0_5 = arith.constant 0 : index
    %7 = vector.load %arg3[%c0_3, %c0_4, %6, %c0_5] : memref<1x1x288x12xbf16, #tpu.memory_space<vmem>>, vector<1x1x256x12xbf16>
    %8 = vector.shape_cast %7 : vector<1x1x256x12xbf16> to vector<256x12xbf16>
    %c0_6 = arith.constant 0 : index
    %c0_7 = arith.constant 0 : index
    %c0_8 = arith.constant 0 : index
    %9 = vector.load %arg4[%c0_6, %c0_7, %c0_8] : memref<3x12x128xbf16, #tpu.memory_space<vmem>>, vector<1x12x128xbf16>
    %10 = vector.shape_cast %9 : vector<1x12x128xbf16> to vector<12x128xbf16>
    %cst = arith.constant dense<0.000000e+00> : vector<256x128xf32>
    %11 = tpu.matmul %8, %10, %cst {dimension_numbers = #tpu.dot_dimension_numbers<[1], [0], [0], [1], [0, 0, 1, 1], [], []>} : vector<256x12xbf16>, vector<12x128xbf16>, vector<256x128xf32> -> vector<256x128xf32>
    %c1_i32 = arith.constant 1 : i32
    %12 = arith.addi %2, %c1_i32 : i32
    %c16_i32_9 = arith.constant 16 : i32
    %13 = arith.muli %12, %c16_i32_9 : i32
    %14 = tpu.assume_multiple %13, 8 : i32
    %c0_10 = arith.constant 0 : index
    %c0_11 = arith.constant 0 : index
    %15 = arith.index_cast %14 : i32 to index
    %c0_12 = arith.constant 0 : index
    %16 = vector.load %arg3[%c0_10, %c0_11, %15, %c0_12] : memref<1x1x288x12xbf16, #tpu.memory_space<vmem>>, vector<1x1x256x12xbf16>
    %17 = vector.shape_cast %16 : vector<1x1x256x12xbf16> to vector<256x12xbf16>
    %c1 = arith.constant 1 : index
    %c0_13 = arith.constant 0 : index
    %c0_14 = arith.constant 0 : index
    %18 = vector.load %arg4[%c1, %c0_13, %c0_14] : memref<3x12x128xbf16, #tpu.memory_space<vmem>>, vector<1x12x128xbf16>
    %19 = vector.shape_cast %18 : vector<1x12x128xbf16> to vector<12x128xbf16>
    %cst_15 = arith.constant dense<0.000000e+00> : vector<256x128xf32>
    %20 = tpu.matmul %17, %19, %cst_15 {dimension_numbers = #tpu.dot_dimension_numbers<[1], [0], [0], [1], [0, 0, 1, 1], [], []>} : vector<256x12xbf16>, vector<12x128xbf16>, vector<256x128xf32> -> vector<256x128xf32>
    %21 = arith.addf %11, %20 : vector<256x128xf32>
    %c2_i32 = arith.constant 2 : i32
    %22 = arith.addi %2, %c2_i32 : i32
    %c16_i32_16 = arith.constant 16 : i32
    %23 = arith.muli %22, %c16_i32_16 : i32
    %24 = tpu.assume_multiple %23, 8 : i32
    %c0_17 = arith.constant 0 : index
    %c0_18 = arith.constant 0 : index
    %25 = arith.index_cast %24 : i32 to index
    %c0_19 = arith.constant 0 : index
    %26 = vector.load %arg3[%c0_17, %c0_18, %25, %c0_19] : memref<1x1x288x12xbf16, #tpu.memory_space<vmem>>, vector<1x1x256x12xbf16>
    %27 = vector.shape_cast %26 : vector<1x1x256x12xbf16> to vector<256x12xbf16>
    %c2 = arith.constant 2 : index
    %c0_20 = arith.constant 0 : index
    %c0_21 = arith.constant 0 : index
    %28 = vector.load %arg4[%c2, %c0_20, %c0_21] : memref<3x12x128xbf16, #tpu.memory_space<vmem>>, vector<1x12x128xbf16>
    %29 = vector.shape_cast %28 : vector<1x12x128xbf16> to vector<12x128xbf16>
    %cst_22 = arith.constant dense<0.000000e+00> : vector<256x128xf32>
    %30 = tpu.matmul %27, %29, %cst_22 {dimension_numbers = #tpu.dot_dimension_numbers<[1], [0], [0], [1], [0, 0, 1, 1], [], []>} : vector<256x12xbf16>, vector<12x128xbf16>, vector<256x128xf32> -> vector<256x128xf32>
    %31 = arith.addf %21, %30 : vector<256x128xf32>
    %32 = vector.broadcast %1 : vector<1x128xf32> to vector<256x128xf32>
    %33 = arith.addf %31, %32 : vector<256x128xf32>
    %cst_23 = arith.constant 0.000000e+00 : f32
    %34 = vector.broadcast %cst_23 : f32 to vector<256x128xf32>
    %35 = arith.maximumf %33, %34 : vector<256x128xf32>
    %c0_24 = arith.constant 0 : index
    %c0_25 = arith.constant 0 : index
    %c0_26 = arith.constant 0 : index
    %36 = vector.load %arg6[%c0_24, %c0_25, %c0_26] : memref<1x256x128xf32, #tpu.memory_space<vmem>>, vector<1x256x128xf32>
    %37 = vector.shape_cast %36 : vector<1x256x128xf32> to vector<256x128xf32>
    %38 = vector.shape_cast %35 : vector<256x128xf32> to vector<1x256x128xf32>
    tpu.vector_store %arg6[%c0_24, %c0_25, %c0_26], %38 {strides = array<i32>} : memref<1x256x128xf32, #tpu.memory_space<vmem>>, vector<1x256x128xf32>,
    return
  }
  func.func @transform_0(%arg0: i32, %arg1: i32, %arg2: i32) -> (i32, i32, i32, i32) {
    %c0_i32 = arith.constant 0 : i32
    %c0_i32_0 = arith.constant 0 : i32
    %c0_i32_1 = arith.constant 0 : i32
    %c0_i32_2 = arith.constant 0 : i32
    return %arg0, %c0_i32, %c0_i32_0, %c0_i32_1 : i32, i32, i32, i32
  }
  func.func @transform_1(%arg0: i32, %arg1: i32, %arg2: i32) -> (i32, i32, i32) {
    %c0_i32 = arith.constant 0 : i32
    %c0_i32_0 = arith.constant 0 : i32
    %c0_i32_1 = arith.constant 0 : i32
    return %c0_i32, %c0_i32_0, %arg1 : i32, i32, i32
  }
  func.func @transform_2(%arg0: i32, %arg1: i32, %arg2: i32) -> (i32, i32) {
    %c0_i32 = arith.constant 0 : i32
    %c0_i32_0 = arith.constant 0 : i32
    return %c0_i32, %arg1 : i32, i32
  }
  func.func @transform_3(%arg0: i32, %arg1: i32, %arg2: i32) -> (i32, i32, i32) {
    %c0_i32 = arith.constant 0 : i32
    return %arg0, %arg2, %arg1 : i32, i32, i32
  }
}

</mosaic_0001>

<llo_original>
// kernel: tpu_custom_call.1
$region0: #{tpu_custom_call.1}
  #allocation0 [shape = 'u32[]', space=smem, size = 0x4, offset = 0x4, fixed_abs, tag = 'smem constant byte address 0x4 - core index']
  #allocation1 [shape = 'u32[144,128]{1,0:T(1,128)}', space=vmem, size = 0x12000, scoped, tag = 'internal scratch']
  %s0 = inlined_call_operand.vmem [shape: bf16[2,1,288,12], index: 0, kind: input, shape index: {}]
  %s1 = inlined_call_operand.vmem [shape: bf16[3,12,128], index: 1, kind: input, shape index: {}]
  %s2 = inlined_call_operand.vmem [shape: f32[1,128], index: 2, kind: input, shape index: {}]
  %s3 = inlined_call_operand.hbm [shape: f32[2,256,128], index: 3, kind: output, shape index: {}]
  %s4 = sld [smem:[#allocation0]]
  $region45: #{tpu_custom_call.1} parent=0
    _
  %s6 = ssub.s32 1, %s4
  %s7 = scalar_select 0, %s6, %s4
  $region1: #{tpu_custom_call.1} parent=0
    #allocation2 [shape = 'u8[262144]{0}', space=vmem, size = 0x40000, scoped, tag = 'output window, operand 0']
    #allocation3 [shape = 's32[2]{0}', space=sflag, size = 0x8, scoped, tag = 'scoped memory for tpu_custom_call.1']
    %8 = vsyncpa [#allocation3], 0
    %s9 = scalar_lea.sflag [#allocation3], 1
    %10 = vsyncpa %s9, 0
    loop: start=0, step=1, limit=4
    $region2: #{tpu_custom_call.1} parent=1 // loop_pre_header
      _
    $region3: #{tpu_custom_call.1} parent=1 // loop_header
      %s12 = sphi 0, %s16
      %p13 = scmp.ge.s32.totalorder %s12, 4
      %s19 = sphi 0, %s38
      %s20 = sphi 0, %s34
      %s21 = sphi 0, %s30
      %s22 = sphi 0, %s19
      %s23 = sphi 0, %s20
      %s24 = sphi 0, %s21
      %s25 = sphi 0, %s22
      %s26 = sphi 0, %s23
      %s27 = sphi 0, %s24
      %s41 = sphi 0, %s43
      %s44 = sphi 0, %s41
      %s45 = sphi 0, %s44
      %s61 = sphi 0, %s45
      %s67 = sphi 0, %s69
      %s70 = sphi 0, %s67
      %s71 = sphi 0, %s70
      %s87 = sphi 0, %s71
      %s93 = sphi 0, %s95
      %s96 = sphi 0, %s93
      %s97 = sphi 0, %s96
      %s113 = sphi 0, %s97
      %s123 = sphi 0, %s125
      %s126 = sphi 0, %s123
      %s127 = sphi 0, %s126
      %s143 = sphi 0, %s127
    $region4: #{tpu_custom_call.1} parent=1 // loop_header_branch
      %15 = sbr.rel (%p13) target = $region8
    $region5: #{tpu_custom_call.1} parent=1 // loop_body
      %s17 = ssub.s32 %s12, 1
      %s18 = ssub.s32 %s12, 2
      %s28 = sadd.s32 1, %s21
      %p29 = scmp.ge.s32.totalorder %s28, 1
      %s30 = scalar_select %p29, 0, %s28
      %s31 = sadd.s32 1, %s20
      %s32 = scalar_select %p29, %s31, %s20
      %p33 = scmp.ge.s32.totalorder %s32, 1
      %s34 = scalar_select %p33, 0, %s32
      %s35 = sadd.s32 1, %s19
      %s36 = scalar_select %p33, %s35, %s19
      %p37 = scmp.ge.s32.totalorder %s36, 2
      %s38 = scalar_select %p37, 0, %s36
      %s39 = ssub.s32 %s19, %s38
      %p40 = scmp.eq.s32.totalorder %s39, 0
      %s42 = sadd.s32 %s41, 1
      %s43 = scalar_select %p40, %s41, %s42
      %p46 = pneg %p40
      %p47 = scmp.eq.s32.totalorder %s12, 1
      %p48 = por %p46, %p47
      %p49 = scmp.ne.s32.totalorder %s41, %s44
      %p50 = scmp.eq.s32.totalorder %s12, 0
      %p51 = por %p49, %p50
      %p52 = scmp.ne.s32.totalorder %s41, %s44
      %p53 = scmp.eq.s32.totalorder %s17, 1
      %p54 = por %p52, %p53
      %p55 = scmp.ne.s32.totalorder %s44, %s45
      %p56 = scmp.eq.s32.totalorder %s17, 0
      %p57 = por %p55, %p56
      %p58 = scmp.ne.s32.totalorder %s44, %s45
      %p59 = scmp.eq.s32.totalorder %s18, 1
      %p60 = por %p58, %p59
      %p62 = scmp.ne.s32.totalorder %s45, %s61
      %p63 = scmp.eq.s32.totalorder %s18, 0
      %p64 = por %p62, %p63
      %s65 = ssub.s32 %s20, %s34
      %p66 = scmp.eq.s32.totalorder %s65, 0
      %s68 = sadd.s32 %s67, 1
      %s69 = scalar_select %p66, %s67, %s68
      %p72 = pneg %p66
      %p73 = scmp.eq.s32.totalorder %s12, 1
      %p74 = por %p72, %p73
      %p75 = scmp.ne.s32.totalorder %s67, %s70
      %p76 = scmp.eq.s32.totalorder %s12, 0
      %p77 = por %p75, %p76
      %p78 = scmp.ne.s32.totalorder %s67, %s70
      %p79 = scmp.eq.s32.totalorder %s17, 1
      %p80 = por %p78, %p79
      %p81 = scmp.ne.s32.totalorder %s70, %s71
      %p82 = scmp.eq.s32.totalorder %s17, 0
      %p83 = por %p81, %p82
      %p84 = scmp.ne.s32.totalorder %s70, %s71
      %p85 = scmp.eq.s32.totalorder %s18, 1
      %p86 = por %p84, %p85
      %p88 = scmp.ne.s32.totalorder %s71, %s87
      %p89 = scmp.eq.s32.totalorder %s18, 0
      %p90 = por %p88, %p89
      %s91 = ssub.s32 %s20, %s34
      %p92 = scmp.eq.s32.totalorder %s91, 0
      %s94 = sadd.s32 %s93, 1
      %s95 = scalar_select %p92, %s93, %s94
      %p98 = pneg %p92
      %p99 = scmp.eq.s32.totalorder %s12, 1
      %p100 = por %p98, %p99
      %p101 = scmp.ne.s32.totalorder %s93, %s96
      %p102 = scmp.eq.s32.totalorder %s12, 0
      %p103 = por %p101, %p102
      %p104 = scmp.ne.s32.totalorder %s93, %s96
      %p105 = scmp.eq.s32.totalorder %s17, 1
      %p106 = por %p104, %p105
      %p107 = scmp.ne.s32.totalorder %s96, %s97
      %p108 = scmp.eq.s32.totalorder %s17, 0
      %p109 = por %p107, %p108
      %p110 = scmp.ne.s32.totalorder %s96, %s97
      %p111 = scmp.eq.s32.totalorder %s18, 1
      %p112 = por %p110, %p111
      %p114 = scmp.ne.s32.totalorder %s97, %s113
      %p115 = scmp.eq.s32.totalorder %s18, 0
      %p116 = por %p114, %p115
      %s117 = ssub.s32 %s19, %s38
      %s118 = ssub.s32 %s21, %s30
      %s119 = sor.u32 %s117, %s118
      %s120 = ssub.s32 %s20, %s34
      %s121 = sor.u32 %s119, %s120
      %p122 = scmp.eq.s32.totalorder %s121, 0
      %s124 = sadd.s32 %s123, 1
      %s125 = scalar_select %p122, %s123, %s124
      %p128 = pneg %p122
      %p129 = scmp.eq.s32.totalorder %s12, 1
      %p130 = por %p128, %p129
      %p131 = scmp.ne.s32.totalorder %s123, %s126
      %p132 = scmp.eq.s32.totalorder %s12, 0
      %p133 = por %p131, %p132
      %p134 = scmp.ne.s32.totalorder %s123, %s126
      %p135 = scmp.eq.s32.totalorder %s17, 1
      %p136 = por %p134, %p135
      %p137 = scmp.ne.s32.totalorder %s126, %s127
      %p138 = scmp.eq.s32.totalorder %s17, 0
      %p139 = por %p137, %p138
      %p140 = scmp.ne.s32.totalorder %s126, %s127
      %p141 = scmp.eq.s32.totalorder %s18, 1
      %p142 = por %p140, %p141
      %p144 = scmp.ne.s32.totalorder %s127, %s143
      %p145 = scmp.eq.s32.totalorder %s18, 0
      %p146 = por %p144, %p145
      %p147 = scmp.le.s32.totalorder 1, %s12
      %p148 = scmp.lt.s32.totalorder %s12, 3
      %p149 = pnand %p147, %p148
      %p150 = pneg %p149
      // Predicated region
      $region9: #{tpu_custom_call.1} parent=5 // pred_check
        _
      $region10: #{tpu_custom_call.1} parent=5 // pred_check_branch
        %152 = sbr.rel (%p149) target = $region12
      $region11: #{tpu_custom_call.1} parent=5 // pred_region
        %s153 = ssub.s32 %s12, 1
        // Predicated region
        $region13: #{tpu_custom_call.1} parent=11 // pred_check
          %p154 = pneg %p83
        $region14: #{tpu_custom_call.1} parent=11 // pred_check_branch
          %156 = sbr.rel (%p154) target = $region16
        $region15: #{tpu_custom_call.1} parent=11 // pred_region
          %p157 = scmp.lt.s32.totalorder %s23, 0
          %s158 = scalar_select %p157, %s23, 0
          %s159 = smul.addr %s158, 4
          %s160 = scalar_lea.vmem %s1, %s159
        $region16: #{tpu_custom_call.1} parent=11 // pred_fallthru
          _
        // Predicated region
        $region17: #{tpu_custom_call.1} parent=11 // pred_check
          %p161 = pneg %p109
        $region18: #{tpu_custom_call.1} parent=11 // pred_check_branch
          %163 = sbr.rel (%p161) target = $region20
        $region19: #{tpu_custom_call.1} parent=11 // pred_region
          %p164 = scmp.lt.s32.totalorder %s23, 0
          %s165 = scalar_select %p164, %s23, 0
          %s166 = scalar_lea.vmem %s2, %s165
        $region20: #{tpu_custom_call.1} parent=11 // pred_fallthru
          _
      $region12: #{tpu_custom_call.1} parent=5 // pred_fallthru
        _
      %p167 = scmp.lt.s32.totalorder %s12, 2
      // Predicated region
      $region21: #{tpu_custom_call.1} parent=5 // pred_check
        %p168 = pneg %p167
      $region22: #{tpu_custom_call.1} parent=5 // pred_check_branch
        %170 = sbr.rel (%p168) target = $region24
      $region23: #{tpu_custom_call.1} parent=5 // pred_region
        // Predicated region
        $region25: #{tpu_custom_call.1} parent=23 // pred_check
          %p171 = pneg %p51
        $region26: #{tpu_custom_call.1} parent=23 // pred_check_branch
          %173 = sbr.rel (%p171) target = $region28
        $region27: #{tpu_custom_call.1} parent=23 // pred_region
          %p174 = scmp.lt.s32.totalorder %s19, 1
          %s175 = scalar_select %p174, %s19, 1
          %s176 = smul.addr %s175, 36
          %s177 = smul.addr %s176, 4
          %s178 = scalar_lea.vmem %s0, %s177
        $region28: #{tpu_custom_call.1} parent=23 // pred_fallthru
          _
      $region24: #{tpu_custom_call.1} parent=5 // pred_fallthru
        _
      %p179 = scmp.le.s32.totalorder 1, %s12
      %p180 = scmp.lt.s32.totalorder %s12, 3
      %p181 = pnand %p179, %p180
      %p182 = pneg %p181
      // Predicated region
      $region29: #{tpu_custom_call.1} parent=5 // pred_check
        _
      $region30: #{tpu_custom_call.1} parent=5 // pred_check_branch
        %184 = sbr.rel (%p181) target = $region32
      $region31: #{tpu_custom_call.1} parent=5 // pred_region
        %s185 = ssub.s32 %s12, 1
        %p186 = scmp.lt.s32.totalorder %s22, 1
        %s187 = scalar_select %p186, %s22, 1
        %s188 = smul.addr %s187, 36
        %s189 = smul.addr %s188, 4
        %s190 = scalar_lea.vmem %s0, %s189
        %p191 = pneg %p57
        %p192 = pneg %p54
        %p193 = scmp.lt.s32.totalorder %s23, 0
        %s194 = scalar_select %p193, %s23, 0
        %s195 = smul.addr %s194, 4
        %s196 = scalar_lea.vmem %s1, %s195
        %p197 = pneg %p83
        %p198 = pneg %p80
        %p199 = scmp.lt.s32.totalorder %s23, 0
        %s200 = scalar_select %p199, %s23, 0
        %s201 = scalar_lea.vmem %s2, %s200
        %p202 = pneg %p109
        %p203 = pneg %p106
        %p204 = pneg %p139
        %p205 = pneg %p136
        %s206 = sand.u32 %s126, 1
        %s207 = scalar_lea.sflag [#allocation3], %s206
        %s208 = sand.u32 %s126, 1
        %s209 = smul.addr %s208, 256
        %s210 = scalar_lea.vmem [#allocation2], %s209
        %p211 = scmp.lt.s32.totalorder %s22, 1
        %s212 = scalar_select %p211, %s22, 1
        %s213 = smul.addr %s212, 36
        %s214 = smul.addr %s213, 4
        %s215 = scalar_lea.vmem %s0, %s214
        %p216 = scmp.lt.s32.totalorder %s23, 0
        %s217 = scalar_select %p216, %s23, 0
        %s218 = smul.addr %s217, 4
        %s219 = scalar_lea.vmem %s1, %s218
        %p220 = scmp.lt.s32.totalorder %s23, 0
        %s221 = scalar_select %p220, %s23, 0
        %s222 = scalar_lea.vmem %s2, %s221
        %s223 = smul.u32 32, %s24
        %s225 = smul.u32 %s24, 16
        %v226 = vld [vmem:[%s222] sm:$0x1]
        %s227 = smul.u32 %s24, 256
        %s228 = sshra.s32 %s227, 3
        %s229 = sand.u32 %s227, 7
        %s230 = smul.addr %s228, 4
        %s231 = scalar_lea.vmem %s215, %s230
        %v232 = vld [vmem:[%s231] sm:$0xf]
        %v233 = vld [vmem:[%s231 + $0x4] sm:$0xf]
        %v234 = vld [vmem:[%s231 + $0x8] sm:$0xf]
        %v235 = vld [vmem:[%s231 + $0xc] sm:$0xf]
        %v236 = vld [vmem:[%s231 + $0x10] sm:$0xf]
        %v237 = vld [vmem:[%s231 + $0x14] sm:$0xf]
        %v238 = vld [vmem:[%s231 + $0x18] sm:$0xf]
        %v239 = vld [vmem:[%s231 + $0x1c] sm:$0xf]
        %v240 = vld [vmem:[%s231 + $0x20] sm:$0xf]
        %v241 = vld [vmem:[%s231 + $0x24] sm:$0xf]
        %v242 = vld [vmem:[%s231 + $0x28] sm:$0xf]
        %v243 = vld [vmem:[%s231 + $0x2c] sm:$0xf]
        %v244 = vld [vmem:[%s231 + $0x30] sm:$0xf]
        %v245 = vld [vmem:[%s231 + $0x34] sm:$0xf]
        %v246 = vld [vmem:[%s231 + $0x38] sm:$0xf]
        %v247 = vld [vmem:[%s231 + $0x3c] sm:$0xf]
        %v248 = vld [vmem:[%s231 + $0x40] sm:$0xf]
        %v249 = vld [vmem:[%s231 + $0x44] sm:$0xf]
        %v250 = vld [vmem:[%s231 + $0x48] sm:$0xf]
        %v251 = vld [vmem:[%s231 + $0x4c] sm:$0xf]
        %v252 = vld [vmem:[%s231 + $0x50] sm:$0xf]
        %v253 = vld [vmem:[%s231 + $0x54] sm:$0xf]
        %v254 = vld [vmem:[%s231 + $0x58] sm:$0xf]
        %v255 = vld [vmem:[%s231 + $0x5c] sm:$0xf]
        %v256 = vld [vmem:[%s231 + $0x60] sm:$0xf]
        %v257 = vld [vmem:[%s231 + $0x64] sm:$0xf]
        %v258 = vld [vmem:[%s231 + $0x68] sm:$0xf]
        %v259 = vld [vmem:[%s231 + $0x6c] sm:$0xf]
        %v260 = vld [vmem:[%s231 + $0x70] sm:$0xf]
        %v261 = vld [vmem:[%s231 + $0x74] sm:$0xf]
        %v262 = vld [vmem:[%s231 + $0x78] sm:$0xf]
        %v263 = vld [vmem:[%s231 + $0x7c] sm:$0xf]
        %v264 = vld [vmem:[%s219] sm:$0xf]
        %v265 = vld [vmem:[%s219 + $0x4] sm:$0x3]
        %s266 = sadd.s32 %s225, 1
        %s267 = smul.u32 %s266, 16
        %s268 = sshra.s32 %s267, 3
        %s269 = sand.u32 %s267, 7
        %s270 = smul.addr %s268, 4
        %s271 = scalar_lea.vmem %s215, %s270
        %v272 = vld [vmem:[%s271] sm:$0xf]
        %v273 = vld [vmem:[%s271 + $0x4] sm:$0xf]
        %v274 = vld [vmem:[%s271 + $0x8] sm:$0xf]
        %v275 = vld [vmem:[%s271 + $0xc] sm:$0xf]
        %v276 = vld [vmem:[%s271 + $0x10] sm:$0xf]
        %v277 = vld [vmem:[%s271 + $0x14] sm:$0xf]
        %v278 = vld [vmem:[%s271 + $0x18] sm:$0xf]
        %v279 = vld [vmem:[%s271 + $0x1c] sm:$0xf]
        %v280 = vld [vmem:[%s271 + $0x20] sm:$0xf]
        %v281 = vld [vmem:[%s271 + $0x24] sm:$0xf]
        %v282 = vld [vmem:[%s271 + $0x28] sm:$0xf]
        %v283 = vld [vmem:[%s271 + $0x2c] sm:$0xf]
        %v284 = vld [vmem:[%s271 + $0x30] sm:$0xf]
        %v285 = vld [vmem:[%s271 + $0x34] sm:$0xf]
        %v286 = vld [vmem:[%s271 + $0x38] sm:$0xf]
        %v287 = vld [vmem:[%s271 + $0x3c] sm:$0xf]
        %v288 = vld [vmem:[%s271 + $0x40] sm:$0xf]
        %v289 = vld [vmem:[%s271 + $0x44] sm:$0xf]
        %v290 = vld [vmem:[%s271 + $0x48] sm:$0xf]
        %v291 = vld [vmem:[%s271 + $0x4c] sm:$0xf]
        %v292 = vld [vmem:[%s271 + $0x50] sm:$0xf]
        %v293 = vld [vmem:[%s271 + $0x54] sm:$0xf]
        %v294 = vld [vmem:[%s271 + $0x58] sm:$0xf]
        %v295 = vld [vmem:[%s271 + $0x5c] sm:$0xf]
        %v296 = vld [vmem:[%s271 + $0x60] sm:$0xf]
        %v297 = vld [vmem:[%s271 + $0x64] sm:$0xf]
        %v298 = vld [vmem:[%s271 + $0x68] sm:$0xf]
        %v299 = vld [vmem:[%s271 + $0x6c] sm:$0xf]
        %v300 = vld [vmem:[%s271 + $0x70] sm:$0xf]
        %v301 = vld [vmem:[%s271 + $0x74] sm:$0xf]
        %v302 = vld [vmem:[%s271 + $0x78] sm:$0xf]
        %v303 = vld [vmem:[%s271 + $0x7c] sm:$0xf]
        %s304 = scalar_lea.vmem %s219, 8
        %v305 = vld [vmem:[%s304] sm:$0xf]
        %v306 = vld [vmem:[%s304 + $0x4] sm:$0x3]
        %v339 = vunpack.c.l.b16 %v272
        %v340 = vunpack.c.l.b16 %v273
        %v341 = vunpack.c.l.b16 %v274
        %v342 = vunpack.c.l.b16 %v275
        %v343 = vunpack.c.l.b16 %v276
        %v344 = vunpack.c.l.b16 %v277
        %v345 = vunpack.c.l.b16 %v278
        %v346 = vunpack.c.l.b16 %v279
        %v347 = vunpack.c.l.b16 %v280
        %v348 = vunpack.c.l.b16 %v281
        %v349 = vunpack.c.l.b16 %v282
        %v350 = vunpack.c.l.b16 %v283
        %v351 = vunpack.c.l.b16 %v284
        %v352 = vunpack.c.l.b16 %v285
        %v353 = vunpack.c.l.b16 %v286
        %v354 = vunpack.c.l.b16 %v287
        %v355 = vunpack.c.l.b16 %v288
        %v356 = vunpack.c.l.b16 %v289
        %v357 = vunpack.c.l.b16 %v290
        %v358 = vunpack.c.l.b16 %v291
        %v359 = vunpack.c.l.b16 %v292
        %v360 = vunpack.c.l.b16 %v293
        %v361 = vunpack.c.l.b16 %v294
        %v362 = vunpack.c.l.b16 %v295
        %v363 = vunpack.c.l.b16 %v296
        %v364 = vunpack.c.l.b16 %v297
        %v365 = vunpack.c.l.b16 %v298
        %v366 = vunpack.c.l.b16 %v299
        %v367 = vunpack.c.l.b16 %v300
        %v368 = vunpack.c.l.b16 %v301
        %v369 = vunpack.c.l.b16 %v302
        %v370 = vunpack.c.l.b16 %v303
        %v371 = vpack.c.b16 %v340, %v339
        %v372 = vpack.c.b16 %v342, %v341
        %v373 = vpack.c.b16 %v344, %v343
        %v374 = vpack.c.b16 %v346, %v345
        %v375 = vpack.c.b16 %v348, %v347
        %v376 = vpack.c.b16 %v350, %v349
        %v377 = vpack.c.b16 %v352, %v351
        %v378 = vpack.c.b16 %v354, %v353
        %v379 = vpack.c.b16 %v356, %v355
        %v380 = vpack.c.b16 %v358, %v357
        %v381 = vpack.c.b16 %v360, %v359
        %v382 = vpack.c.b16 %v362, %v361
        %v383 = vpack.c.b16 %v364, %v363
        %v384 = vpack.c.b16 %v366, %v365
        %v385 = vpack.c.b16 %v368, %v367
        %v386 = vpack.c.b16 %v370, %v369
        %v389 = vunpack.c.l.b16 %v305
        %v390 = vunpack.c.l.b16 %v306
        %v391 = vpack.c.b16 %v390, %v389
        %vm392 = vcmask 97280
        %v394 = vsel %vm392, %v371, 0
        %v397 = vsel %vm392, %v372, 0
        %v400 = vsel %vm392, %v373, 0
        %v403 = vsel %vm392, %v374, 0
        %v406 = vsel %vm392, %v375, 0
        %v409 = vsel %vm392, %v376, 0
        %v412 = vsel %vm392, %v377, 0
        %v415 = vsel %vm392, %v378, 0
        %v418 = vsel %vm392, %v379, 0
        %v421 = vsel %vm392, %v380, 0
        %v424 = vsel %vm392, %v381, 0
        %v427 = vsel %vm392, %v382, 0
        %v430 = vsel %vm392, %v383, 0
        %v433 = vsel %vm392, %v384, 0
        %v436 = vsel %vm392, %v385, 0
        %v439 = vsel %vm392, %v386, 0
        %vm441 = vcmask 1045504
        %v443 = vsel %vm441, %v391, 0
        %445 = vmatprep.subr.bf16.mxu0 0
        %446 = vmatpush1.bf16.msra.mxu0 %v443
        %447 = vmatprep.subr.bf16.mxu0 0
        %448 = vmatpush1.bf16.msra.mxu0 0
        %449 = vmatprep.subr.bf16.mxu0 0
        %450 = vmatpush1.bf16.msra.mxu0 0
        %451 = vmatprep.subr.bf16.mxu0 0
        %452 = vmatpush1.bf16.msra.mxu0 0
        %453 = vmatprep.subr.bf16.mxu0 0
        %454 = vmatpush1.bf16.msra.mxu0 0
        %455 = vmatprep.subr.bf16.mxu0 0
        %456 = vmatpush1.bf16.msra.mxu0 0
        %457 = vmatprep.subr.bf16.mxu0 0
        %458 = vmatpush1.bf16.msra.mxu0 0
        %459 = vmatprep.subr.bf16.mxu0 0
        %460 = vmatpush1.bf16.msra.mxu0 0
        %461 = vmatprep.subr.bf16.mxu0 0
        %462 = vmatpush1.bf16.msra.mxu0 0
        %463 = vmatprep.subr.bf16.mxu0 0
        %464 = vmatpush1.bf16.msra.mxu0 0
        %465 = vmatprep.subr.bf16.mxu0 0
        %466 = vmatpush1.bf16.msra.mxu0 0
        %467 = vmatprep.subr.bf16.mxu0 0
        %468 = vmatpush1.bf16.msra.mxu0 0
        %469 = vmatprep.subr.bf16.mxu0 0
        %470 = vmatpush1.bf16.msra.mxu0 0
        %471 = vmatprep.subr.bf16.mxu0 0
        %472 = vmatpush1.bf16.msra.mxu0 0
        %473 = vmatprep.subr.bf16.mxu0 0
        %474 = vmatpush1.bf16.msra.mxu0 0
        %475 = vmatprep.subr.bf16.mxu0 0
        %476 = vmatpush1.bf16.msra.mxu0 0
        %477 = vmatprep.mubr.bf16.mxu0 0
        %478 = vmatmul.mubr.bf16.gmra.mrb[0].mxu0 %v394
        %v479 = vpop.f32.mrb[0].mxu0
        %v480 = vadd.f32 0.0, %v479
        %v481 = vpop.f32.mrb[0].mxu0
        %v482 = vpop.f32.mrb[0].mxu0
        %v483 = vadd.f32 0.0, %v482
        %v484 = vpop.f32.mrb[0].mxu0
        %485 = vmatprep.mubr.bf16.mxu0 0
        %486 = vmatmul.mubr.bf16.gmra.mrb[0].mxu0 %v397
        %v487 = vpop.f32.mrb[0].mxu0
        %v488 = vadd.f32 0.0, %v487
        %v489 = vpop.f32.mrb[0].mxu0
        %v490 = vpop.f32.mrb[0].mxu0
        %v491 = vadd.f32 0.0, %v490
        %v492 = vpop.f32.mrb[0].mxu0
        %493 = vmatprep.mubr.bf16.mxu0 0
        %494 = vmatmul.mubr.bf16.gmra.mrb[0].mxu0 %v400
        %v495 = vpop.f32.mrb[0].mxu0
        %v496 = vadd.f32 0.0, %v495
        %v497 = vpop.f32.mrb[0].mxu0
        %v498 = vpop.f32.mrb[0].mxu0
        %v499 = vadd.f32 0.0, %v498
        %v500 = vpop.f32.mrb[0].mxu0
        %501 = vmatprep.mubr.bf16.mxu0 0
        %502 = vmatmul.mubr.bf16.gmra.mrb[0].mxu0 %v403
        %v503 = vpop.f32.mrb[0].mxu0
        %v504 = vadd.f32 0.0, %v503
        %v505 = vpop.f32.mrb[0].mxu0
        %v506 = vpop.f32.mrb[0].mxu0
        %v507 = vadd.f32 0.0, %v506
        %v508 = vpop.f32.mrb[0].mxu0
        %509 = vmatprep.mubr.bf16.mxu0 0
        %510 = vmatmul.mubr.bf16.gmra.mrb[0].mxu0 %v406
        %v511 = vpop.f32.mrb[0].mxu0
        %v512 = vadd.f32 0.0, %v511
        %v513 = vpop.f32.mrb[0].mxu0
        %v514 = vpop.f32.mrb[0].mxu0
        %v515 = vadd.f32 0.0, %v514
        %v516 = vpop.f32.mrb[0].mxu0
        %517 = vmatprep.mubr.bf16.mxu0 0
        %518 = vmatmul.mubr.bf16.gmra.mrb[0].mxu0 %v409
        %v519 = vpop.f32.mrb[0].mxu0
        %v520 = vadd.f32 0.0, %v519
        %v521 = vpop.f32.mrb[0].mxu0
        %v522 = vpop.f32.mrb[0].mxu0
        %v523 = vadd.f32 0.0, %v522
        %v524 = vpop.f32.mrb[0].mxu0
        %525 = vmatprep.mubr.bf16.mxu0 0
        %526 = vmatmul.mubr.bf16.gmra.mrb[0].mxu0 %v412
        %v527 = vpop.f32.mrb[0].mxu0
        %v528 = vadd.f32 0.0, %v527
        %v529 = vpop.f32.mrb[0].mxu0
        %v530 = vpop.f32.mrb[0].mxu0
        %v531 = vadd.f32 0.0, %v530
        %v532 = vpop.f32.mrb[0].mxu0
        %533 = vmatprep.mubr.bf16.mxu0 0
        %534 = vmatmul.mubr.bf16.gmra.mrb[0].mxu0 %v415
        %v535 = vpop.f32.mrb[0].mxu0
        %v536 = vadd.f32 0.0, %v535
        %v537 = vpop.f32.mrb[0].mxu0
        %v538 = vpop.f32.mrb[0].mxu0
        %v539 = vadd.f32 0.0, %v538
        %v540 = vpop.f32.mrb[0].mxu0
        %541 = vmatprep.mubr.bf16.mxu0 0
        %542 = vmatmul.mubr.bf16.gmra.mrb[0].mxu0 %v418
        %v543 = vpop.f32.mrb[0].mxu0
        %v544 = vadd.f32 0.0, %v543
        %v545 = vpop.f32.mrb[0].mxu0
        %v546 = vpop.f32.mrb[0].mxu0
        %v547 = vadd.f32 0.0, %v546
        %v548 = vpop.f32.mrb[0].mxu0
        %549 = vmatprep.mubr.bf16.mxu0 0
        %550 = vmatmul.mubr.bf16.gmra.mrb[0].mxu0 %v421
        %v551 = vpop.f32.mrb[0].mxu0
        %v552 = vadd.f32 0.0, %v551
        %v553 = vpop.f32.mrb[0].mxu0
        %v554 = vpop.f32.mrb[0].mxu0
        %v555 = vadd.f32 0.0, %v554
        %v556 = vpop.f32.mrb[0].mxu0
        %557 = vmatprep.mubr.bf16.mxu0 0
        %558 = vmatmul.mubr.bf16.gmra.mrb[0].mxu0 %v424
        %v559 = vpop.f32.mrb[0].mxu0
        %v560 = vadd.f32 0.0, %v559
        %v561 = vpop.f32.mrb[0].mxu0
        %v562 = vpop.f32.mrb[0].mxu0
        %v563 = vadd.f32 0.0, %v562
        %v564 = vpop.f32.mrb[0].mxu0
        %565 = vmatprep.mubr.bf16.mxu0 0
        %566 = vmatmul.mubr.bf16.gmra.mrb[0].mxu0 %v427
        %v567 = vpop.f32.mrb[0].mxu0
        %v568 = vadd.f32 0.0, %v567
        %v569 = vpop.f32.mrb[0].mxu0
        %v570 = vpop.f32.mrb[0].mxu0
        %v571 = vadd.f32 0.0, %v570
        %v572 = vpop.f32.mrb[0].mxu0
        %573 = vmatprep.mubr.bf16.mxu0 0
        %574 = vmatmul.mubr.bf16.gmra.mrb[0].mxu0 %v430
        %v575 = vpop.f32.mrb[0].mxu0
        %v576 = vadd.f32 0.0, %v575
        %v577 = vpop.f32.mrb[0].mxu0
        %v578 = vpop.f32.mrb[0].mxu0
        %v579 = vadd.f32 0.0, %v578
        %v580 = vpop.f32.mrb[0].mxu0
        %581 = vmatprep.mubr.bf16.mxu0 0
        %582 = vmatmul.mubr.bf16.gmra.mrb[0].mxu0 %v433
        %v583 = vpop.f32.mrb[0].mxu0
        %v584 = vadd.f32 0.0, %v583
        %v585 = vpop.f32.mrb[0].mxu0
        %v586 = vpop.f32.mrb[0].mxu0
        %v587 = vadd.f32 0.0, %v586
        %v588 = vpop.f32.mrb[0].mxu0
        %589 = vmatprep.mubr.bf16.mxu0 0
        %590 = vmatmul.mubr.bf16.gmra.mrb[0].mxu0 %v436
        %v591 = vpop.f32.mrb[0].mxu0
        %v592 = vadd.f32 0.0, %v591
        %v593 = vpop.f32.mrb[0].mxu0
        %v594 = vpop.f32.mrb[0].mxu0
        %v595 = vadd.f32 0.0, %v594
        %v596 = vpop.f32.mrb[0].mxu0
        %597 = vmatprep.mubr.bf16.mxu0 0
        %598 = vmatmul.mubr.bf16.gmra.mrb[0].mxu0 %v439
        %v599 = vpop.f32.mrb[0].mxu0
        %v600 = vadd.f32 0.0, %v599
        %v601 = vpop.f32.mrb[0].mxu0
        %v602 = vpop.f32.mrb[0].mxu0
        %v603 = vadd.f32 0.0, %v602
        %v604 = vpop.f32.mrb[0].mxu0
        %605 = vdwg.mxu0
        %v638 = vunpack.c.l.b16 %v232
        %v639 = vunpack.c.l.b16 %v233
        %v640 = vunpack.c.l.b16 %v234
        %v641 = vunpack.c.l.b16 %v235
        %v642 = vunpack.c.l.b16 %v236
        %v643 = vunpack.c.l.b16 %v237
        %v644 = vunpack.c.l.b16 %v238
        %v645 = vunpack.c.l.b16 %v239
        %v646 = vunpack.c.l.b16 %v240
        %v647 = vunpack.c.l.b16 %v241
        %v648 = vunpack.c.l.b16 %v242
        %v649 = vunpack.c.l.b16 %v243
        %v650 = vunpack.c.l.b16 %v244
        %v651 = vunpack.c.l.b16 %v245
        %v652 = vunpack.c.l.b16 %v246
        %v653 = vunpack.c.l.b16 %v247
        %v654 = vunpack.c.l.b16 %v248
        %v655 = vunpack.c.l.b16 %v249
        %v656 = vunpack.c.l.b16 %v250
        %v657 = vunpack.c.l.b16 %v251
        %v658 = vunpack.c.l.b16 %v252
        %v659 = vunpack.c.l.b16 %v253
        %v660 = vunpack.c.l.b16 %v254
        %v661 = vunpack.c.l.b16 %v255
        %v662 = vunpack.c.l.b16 %v256
        %v663 = vunpack.c.l.b16 %v257
        %v664 = vunpack.c.l.b16 %v258
        %v665 = vunpack.c.l.b16 %v259
        %v666 = vunpack.c.l.b16 %v260
        %v667 = vunpack.c.l.b16 %v261
        %v668 = vunpack.c.l.b16 %v262
        %v669 = vunpack.c.l.b16 %v263
        %v670 = vpack.c.b16 %v639, %v638
        %v671 = vpack.c.b16 %v641, %v640
        %v672 = vpack.c.b16 %v643, %v642
        %v673 = vpack.c.b16 %v645, %v644
        %v674 = vpack.c.b16 %v647, %v646
        %v675 = vpack.c.b16 %v649, %v648
        %v676 = vpack.c.b16 %v651, %v650
        %v677 = vpack.c.b16 %v653, %v652
        %v678 = vpack.c.b16 %v655, %v654
        %v679 = vpack.c.b16 %v657, %v656
        %v680 = vpack.c.b16 %v659, %v658
        %v681 = vpack.c.b16 %v661, %v660
        %v682 = vpack.c.b16 %v663, %v662
        %v683 = vpack.c.b16 %v665, %v664
        %v684 = vpack.c.b16 %v667, %v666
        %v685 = vpack.c.b16 %v669, %v668
        %v688 = vunpack.c.l.b16 %v264
        %v689 = vunpack.c.l.b16 %v265
        %v690 = vpack.c.b16 %v689, %v688
        %v692 = vsel %vm392, %v670, 0
        %v695 = vsel %vm392, %v671, 0
        %v698 = vsel %vm392, %v672, 0
        %v701 = vsel %vm392, %v673, 0
        %v704 = vsel %vm392, %v674, 0
        %v707 = vsel %vm392, %v675, 0
        %v710 = vsel %vm392, %v676, 0
        %v713 = vsel %vm392, %v677, 0
        %v716 = vsel %vm392, %v678, 0
        %v719 = vsel %vm392, %v679, 0
        %v722 = vsel %vm392, %v680, 0
        %v725 = vsel %vm392, %v681, 0
        %v728 = vsel %vm392, %v682, 0
        %v731 = vsel %vm392, %v683, 0
        %v734 = vsel %vm392, %v684, 0
        %v737 = vsel %vm392, %v685, 0
        %v740 = vsel %vm441, %v690, 0
        %742 = vmatprep.subr.bf16.mxu0 0
        %743 = vmatpush1.bf16.msra.mxu0 %v740
        %744 = vmatprep.subr.bf16.mxu0 0
        %745 = vmatpush1.bf16.msra.mxu0 0
        %746 = vmatprep.subr.bf16.mxu0 0
        %747 = vmatpush1.bf16.msra.mxu0 0
        %748 = vmatprep.subr.bf16.mxu0 0
        %749 = vmatpush1.bf16.msra.mxu0 0
        %750 = vmatprep.subr.bf16.mxu0 0
        %751 = vmatpush1.bf16.msra.mxu0 0
        %752 = vmatprep.subr.bf16.mxu0 0
        %753 = vmatpush1.bf16.msra.mxu0 0
        %754 = vmatprep.subr.bf16.mxu0 0
        %755 = vmatpush1.bf16.msra.mxu0 0
        %756 = vmatprep.subr.bf16.mxu0 0
        %757 = vmatpush1.bf16.msra.mxu0 0
        %758 = vmatprep.subr.bf16.mxu0 0
        %759 = vmatpush1.bf16.msra.mxu0 0
        %760 = vmatprep.subr.bf16.mxu0 0
        %761 = vmatpush1.bf16.msra.mxu0 0
        %762 = vmatprep.subr.bf16.mxu0 0
        %763 = vmatpush1.bf16.msra.mxu0 0
        %764 = vmatprep.subr.bf16.mxu0 0
        %765 = vmatpush1.bf16.msra.mxu0 0
        %766 = vmatprep.subr.bf16.mxu0 0
        %767 = vmatpush1.bf16.msra.mxu0 0
        %768 = vmatprep.subr.bf16.mxu0 0
        %769 = vmatpush1.bf16.msra.mxu0 0
        %770 = vmatprep.subr.bf16.mxu0 0
        %771 = vmatpush1.bf16.msra.mxu0 0
        %772 = vmatprep.subr.bf16.mxu0 0
        %773 = vmatpush1.bf16.msra.mxu0 0
        %774 = vmatprep.mubr.bf16.mxu0 0
        %775 = vmatmul.mubr.bf16.gmra.mrb[0].mxu0 %v692
        %v776 = vpop.f32.mrb[0].mxu0
        %v777 = vadd.f32 %v480, %v776
        %v778 = vpop.f32.mrb[0].mxu0
        %v779 = vpop.f32.mrb[0].mxu0
        %v780 = vadd.f32 %v483, %v779
        %v781 = vpop.f32.mrb[0].mxu0
        %782 = vmatprep.mubr.bf16.mxu0 0
        %783 = vmatmul.mubr.bf16.gmra.mrb[0].mxu0 %v695
        %v784 = vpop.f32.mrb[0].mxu0
        %v785 = vadd.f32 %v488, %v784
        %v786 = vpop.f32.mrb[0].mxu0
        %v787 = vpop.f32.mrb[0].mxu0
        %v788 = vadd.f32 %v491, %v787
        %v789 = vpop.f32.mrb[0].mxu0
        %790 = vmatprep.mubr.bf16.mxu0 0
        %791 = vmatmul.mubr.bf16.gmra.mrb[0].mxu0 %v698
        %v792 = vpop.f32.mrb[0].mxu0
        %v793 = vadd.f32 %v496, %v792
        %v794 = vpop.f32.mrb[0].mxu0
        %v795 = vpop.f32.mrb[0].mxu0
        %v796 = vadd.f32 %v499, %v795
        %v797 = vpop.f32.mrb[0].mxu0
        %798 = vmatprep.mubr.bf16.mxu0 0
        %799 = vmatmul.mubr.bf16.gmra.mrb[0].mxu0 %v701
        %v800 = vpop.f32.mrb[0].mxu0
        %v801 = vadd.f32 %v504, %v800
        %v802 = vpop.f32.mrb[0].mxu0
        %v803 = vpop.f32.mrb[0].mxu0
        %v804 = vadd.f32 %v507, %v803
        %v805 = vpop.f32.mrb[0].mxu0
        %806 = vmatprep.mubr.bf16.mxu0 0
        %807 = vmatmul.mubr.bf16.gmra.mrb[0].mxu0 %v704
        %v808 = vpop.f32.mrb[0].mxu0
        %v809 = vadd.f32 %v512, %v808
        %v810 = vpop.f32.mrb[0].mxu0
        %v811 = vpop.f32.mrb[0].mxu0
        %v812 = vadd.f32 %v515, %v811
        %v813 = vpop.f32.mrb[0].mxu0
        %814 = vmatprep.mubr.bf16.mxu0 0
        %815 = vmatmul.mubr.bf16.gmra.mrb[0].mxu0 %v707
        %v816 = vpop.f32.mrb[0].mxu0
        %v817 = vadd.f32 %v520, %v816
        %v818 = vpop.f32.mrb[0].mxu0
        %v819 = vpop.f32.mrb[0].mxu0
        %v820 = vadd.f32 %v523, %v819
        %v821 = vpop.f32.mrb[0].mxu0
        %822 = vmatprep.mubr.bf16.mxu0 0
        %823 = vmatmul.mubr.bf16.gmra.mrb[0].mxu0 %v710
        %v824 = vpop.f32.mrb[0].mxu0
        %v825 = vadd.f32 %v528, %v824
        %v826 = vpop.f32.mrb[0].mxu0
        %v827 = vpop.f32.mrb[0].mxu0
        %v828 = vadd.f32 %v531, %v827
        %v829 = vpop.f32.mrb[0].mxu0
        %830 = vmatprep.mubr.bf16.mxu0 0
        %831 = vmatmul.mubr.bf16.gmra.mrb[0].mxu0 %v713
        %v832 = vpop.f32.mrb[0].mxu0
        %v833 = vadd.f32 %v536, %v832
        %v834 = vpop.f32.mrb[0].mxu0
        %v835 = vpop.f32.mrb[0].mxu0
        %v836 = vadd.f32 %v539, %v835
        %v837 = vpop.f32.mrb[0].mxu0
        %838 = vmatprep.mubr.bf16.mxu0 0
        %839 = vmatmul.mubr.bf16.gmra.mrb[0].mxu0 %v716
        %v840 = vpop.f32.mrb[0].mxu0
        %v841 = vadd.f32 %v544, %v840
        %v842 = vpop.f32.mrb[0].mxu0
        %v843 = vpop.f32.mrb[0].mxu0
        %v844 = vadd.f32 %v547, %v843
        %v845 = vpop.f32.mrb[0].mxu0
        %846 = vmatprep.mubr.bf16.mxu0 0
        %847 = vmatmul.mubr.bf16.gmra.mrb[0].mxu0 %v719
        %v848 = vpop.f32.mrb[0].mxu0
        %v849 = vadd.f32 %v552, %v848
        %v850 = vpop.f32.mrb[0].mxu0
        %v851 = vpop.f32.mrb[0].mxu0
        %v852 = vadd.f32 %v555, %v851
        %v853 = vpop.f32.mrb[0].mxu0
        %854 = vmatprep.mubr.bf16.mxu0 0
        %855 = vmatmul.mubr.bf16.gmra.mrb[0].mxu0 %v722
        %v856 = vpop.f32.mrb[0].mxu0
        %v857 = vadd.f32 %v560, %v856
        %v858 = vpop.f32.mrb[0].mxu0
        %v859 = vpop.f32.mrb[0].mxu0
        %v860 = vadd.f32 %v563, %v859
        %v861 = vpop.f32.mrb[0].mxu0
        %862 = vmatprep.mubr.bf16.mxu0 0
        %863 = vmatmul.mubr.bf16.gmra.mrb[0].mxu0 %v725
        %v864 = vpop.f32.mrb[0].mxu0
        %v865 = vadd.f32 %v568, %v864
        %v866 = vpop.f32.mrb[0].mxu0
        %v867 = vpop.f32.mrb[0].mxu0
        %v868 = vadd.f32 %v571, %v867
        %v869 = vpop.f32.mrb[0].mxu0
        %870 = vmatprep.mubr.bf16.mxu0 0
        %871 = vmatmul.mubr.bf16.gmra.mrb[0].mxu0 %v728
        %v872 = vpop.f32.mrb[0].mxu0
        %v873 = vadd.f32 %v576, %v872
        %v874 = vpop.f32.mrb[0].mxu0
        %v875 = vpop.f32.mrb[0].mxu0
        %v876 = vadd.f32 %v579, %v875
        %v877 = vpop.f32.mrb[0].mxu0
        %878 = vmatprep.mubr.bf16.mxu0 0
        %879 = vmatmul.mubr.bf16.gmra.mrb[0].mxu0 %v731
        %v880 = vpop.f32.mrb[0].mxu0
        %v881 = vadd.f32 %v584, %v880
        %v882 = vpop.f32.mrb[0].mxu0
        %v883 = vpop.f32.mrb[0].mxu0
        %v884 = vadd.f32 %v587, %v883
        %v885 = vpop.f32.mrb[0].mxu0
        %886 = vmatprep.mubr.bf16.mxu0 0
        %887 = vmatmul.mubr.bf16.gmra.mrb[0].mxu0 %v734
        %v888 = vpop.f32.mrb[0].mxu0
        %v889 = vadd.f32 %v592, %v888
        %v890 = vpop.f32.mrb[0].mxu0
        %v891 = vpop.f32.mrb[0].mxu0
        %v892 = vadd.f32 %v595, %v891
        %v893 = vpop.f32.mrb[0].mxu0
        %894 = vmatprep.mubr.bf16.mxu0 0
        %895 = vmatmul.mubr.bf16.gmra.mrb[0].mxu0 %v737
        %v896 = vpop.f32.mrb[0].mxu0
        %v897 = vadd.f32 %v600, %v896
        %v898 = vpop.f32.mrb[0].mxu0
        %v899 = vpop.f32.mrb[0].mxu0
        %v900 = vadd.f32 %v603, %v899
        %v901 = vpop.f32.mrb[0].mxu0
        %902 = vdwg.mxu0
        %s903 = sadd.s32 %s225, 2
        %s904 = smul.u32 %s903, 16
        %s905 = sshra.s32 %s904, 3
        %s906 = sand.u32 %s904, 7
        %s907 = smul.addr %s905, 4
        %s908 = scalar_lea.vmem %s215, %s907
        %v909 = vld [vmem:[%s908] sm:$0xf]
        %v910 = vld [vmem:[%s908 + $0x4] sm:$0xf]
        %v911 = vld [vmem:[%s908 + $0x8] sm:$0xf]
        %v912 = vld [vmem:[%s908 + $0xc] sm:$0xf]
        %v913 = vld [vmem:[%s908 + $0x10] sm:$0xf]
        %v914 = vld [vmem:[%s908 + $0x14] sm:$0xf]
        %v915 = vld [vmem:[%s908 + $0x18] sm:$0xf]
        %v916 = vld [vmem:[%s908 + $0x1c] sm:$0xf]
        %v917 = vld [vmem:[%s908 + $0x20] sm:$0xf]
        %v918 = vld [vmem:[%s908 + $0x24] sm:$0xf]
        %v919 = vld [vmem:[%s908 + $0x28] sm:$0xf]
        %v920 = vld [vmem:[%s908 + $0x2c] sm:$0xf]
        %v921 = vld [vmem:[%s908 + $0x30] sm:$0xf]
        %v922 = vld [vmem:[%s908 + $0x34] sm:$0xf]
        %v923 = vld [vmem:[%s908 + $0x38] sm:$0xf]
        %v924 = vld [vmem:[%s908 + $0x3c] sm:$0xf]
        %v925 = vld [vmem:[%s908 + $0x40] sm:$0xf]
        %v926 = vld [vmem:[%s908 + $0x44] sm:$0xf]
        %v927 = vld [vmem:[%s908 + $0x48] sm:$0xf]
        %v928 = vld [vmem:[%s908 + $0x4c] sm:$0xf]
        %v929 = vld [vmem:[%s908 + $0x50] sm:$0xf]
        %v930 = vld [vmem:[%s908 + $0x54] sm:$0xf]
        %v931 = vld [vmem:[%s908 + $0x58] sm:$0xf]
        %v932 = vld [vmem:[%s908 + $0x5c] sm:$0xf]
        %v933 = vld [vmem:[%s908 + $0x60] sm:$0xf]
        %v934 = vld [vmem:[%s908 + $0x64] sm:$0xf]
        %v935 = vld [vmem:[%s908 + $0x68] sm:$0xf]
        %v936 = vld [vmem:[%s908 + $0x6c] sm:$0xf]
        %v937 = vld [vmem:[%s908 + $0x70] sm:$0xf]
        %v938 = vld [vmem:[%s908 + $0x74] sm:$0xf]
        %v939 = vld [vmem:[%s908 + $0x78] sm:$0xf]
        %v940 = vld [vmem:[%s908 + $0x7c] sm:$0xf]
        %s941 = scalar_lea.vmem %s219, 16
        %v942 = vld [vmem:[%s941] sm:$0xf]
        %v943 = vld [vmem:[%s941 + $0x4] sm:$0x3]
        %v976 = vunpack.c.l.b16 %v909
        %v977 = vunpack.c.l.b16 %v910
        %v978 = vunpack.c.l.b16 %v911
        %v979 = vunpack.c.l.b16 %v912
        %v980 = vunpack.c.l.b16 %v913
        %v981 = vunpack.c.l.b16 %v914
        %v982 = vunpack.c.l.b16 %v915
        %v983 = vunpack.c.l.b16 %v916
        %v984 = vunpack.c.l.b16 %v917
        %v985 = vunpack.c.l.b16 %v918
        %v986 = vunpack.c.l.b16 %v919
        %v987 = vunpack.c.l.b16 %v920
        %v988 = vunpack.c.l.b16 %v921
        %v989 = vunpack.c.l.b16 %v922
        %v990 = vunpack.c.l.b16 %v923
        %v991 = vunpack.c.l.b16 %v924
        %v992 = vunpack.c.l.b16 %v925
        %v993 = vunpack.c.l.b16 %v926
        %v994 = vunpack.c.l.b16 %v927
        %v995 = vunpack.c.l.b16 %v928
        %v996 = vunpack.c.l.b16 %v929
        %v997 = vunpack.c.l.b16 %v930
        %v998 = vunpack.c.l.b16 %v931
        %v999 = vunpack.c.l.b16 %v932
        %v1000 = vunpack.c.l.b16 %v933
        %v1001 = vunpack.c.l.b16 %v934
        %v1002 = vunpack.c.l.b16 %v935
        %v1003 = vunpack.c.l.b16 %v936
        %v1004 = vunpack.c.l.b16 %v937
        %v1005 = vunpack.c.l.b16 %v938
        %v1006 = vunpack.c.l.b16 %v939
        %v1007 = vunpack.c.l.b16 %v940
        %v1008 = vpack.c.b16 %v977, %v976
        %v1009 = vpack.c.b16 %v979, %v978
        %v1010 = vpack.c.b16 %v981, %v980
        %v1011 = vpack.c.b16 %v983, %v982
        %v1012 = vpack.c.b16 %v985, %v984
        %v1013 = vpack.c.b16 %v987, %v986
        %v1014 = vpack.c.b16 %v989, %v988
        %v1015 = vpack.c.b16 %v991, %v990
        %v1016 = vpack.c.b16 %v993, %v992
        %v1017 = vpack.c.b16 %v995, %v994
        %v1018 = vpack.c.b16 %v997, %v996
        %v1019 = vpack.c.b16 %v999, %v998
        %v1020 = vpack.c.b16 %v1001, %v1000
        %v1021 = vpack.c.b16 %v1003, %v1002
        %v1022 = vpack.c.b16 %v1005, %v1004
        %v1023 = vpack.c.b16 %v1007, %v1006
        %v1026 = vunpack.c.l.b16 %v942
        %v1027 = vunpack.c.l.b16 %v943
        %v1028 = vpack.c.b16 %v1027, %v1026
        %v1030 = vsel %vm392, %v1008, 0
        %v1033 = vsel %vm392, %v1009, 0
        %v1036 = vsel %vm392, %v1010, 0
        %v1039 = vsel %vm392, %v1011, 0
        %v1042 = vsel %vm392, %v1012, 0
        %v1045 = vsel %vm392, %v1013, 0
        %v1048 = vsel %vm392, %v1014, 0
        %v1051 = vsel %vm392, %v1015, 0
        %v1054 = vsel %vm392, %v1016, 0
        %v1057 = vsel %vm392, %v1017, 0
        %v1060 = vsel %vm392, %v1018, 0
        %v1063 = vsel %vm392, %v1019, 0
        %v1066 = vsel %vm392, %v1020, 0
        %v1069 = vsel %vm392, %v1021, 0
        %v1072 = vsel %vm392, %v1022, 0
        %v1075 = vsel %vm392, %v1023, 0
        %v1078 = vsel %vm441, %v1028, 0
        %1080 = vmatprep.subr.bf16.mxu0 0
        %1081 = vmatpush1.bf16.msra.mxu0 %v1078
        %1082 = vmatprep.subr.bf16.mxu0 0
        %1083 = vmatpush1.bf16.msra.mxu0 0
        %1084 = vmatprep.subr.bf16.mxu0 0
        %1085 = vmatpush1.bf16.msra.mxu0 0
        %1086 = vmatprep.subr.bf16.mxu0 0
        %1087 = vmatpush1.bf16.msra.mxu0 0
        %1088 = vmatprep.subr.bf16.mxu0 0
        %1089 = vmatpush1.bf16.msra.mxu0 0
        %1090 = vmatprep.subr.bf16.mxu0 0
        %1091 = vmatpush1.bf16.msra.mxu0 0
        %1092 = vmatprep.subr.bf16.mxu0 0
        %1093 = vmatpush1.bf16.msra.mxu0 0
        %1094 = vmatprep.subr.bf16.mxu0 0
        %1095 = vmatpush1.bf16.msra.mxu0 0
        %1096 = vmatprep.subr.bf16.mxu0 0
        %1097 = vmatpush1.bf16.msra.mxu0 0
        %1098 = vmatprep.subr.bf16.mxu0 0
        %1099 = vmatpush1.bf16.msra.mxu0 0
        %1100 = vmatprep.subr.bf16.mxu0 0
        %1101 = vmatpush1.bf16.msra.mxu0 0
        %1102 = vmatprep.subr.bf16.mxu0 0
        %1103 = vmatpush1.bf16.msra.mxu0 0
        %1104 = vmatprep.subr.bf16.mxu0 0
        %1105 = vmatpush1.bf16.msra.mxu0 0
        %1106 = vmatprep.subr.bf16.mxu0 0
        %1107 = vmatpush1.bf16.msra.mxu0 0
        %1108 = vmatprep.subr.bf16.mxu0 0
        %1109 = vmatpush1.bf16.msra.mxu0 0
        %1110 = vmatprep.subr.bf16.mxu0 0
        %1111 = vmatpush1.bf16.msra.mxu0 0
        %1112 = vmatprep.mubr.bf16.mxu0 0
        %1113 = vmatmul.mubr.bf16.gmra.mrb[0].mxu0 %v1030
        %v1114 = vpop.f32.mrb[0].mxu0
        %v1115 = vadd.f32 0.0, %v1114
        %v1116 = vpop.f32.mrb[0].mxu0
        %v1117 = vpop.f32.mrb[0].mxu0
        %v1118 = vadd.f32 0.0, %v1117
        %v1119 = vpop.f32.mrb[0].mxu0
        %1120 = vmatprep.mubr.bf16.mxu0 0
        %1121 = vmatmul.mubr.bf16.gmra.mrb[0].mxu0 %v1033
        %v1122 = vpop.f32.mrb[0].mxu0
        %v1123 = vadd.f32 0.0, %v1122
        %v1124 = vpop.f32.mrb[0].mxu0
        %v1125 = vpop.f32.mrb[0].mxu0
        %v1126 = vadd.f32 0.0, %v1125
        %v1127 = vpop.f32.mrb[0].mxu0
        %1128 = vmatprep.mubr.bf16.mxu0 0
        %1129 = vmatmul.mubr.bf16.gmra.mrb[0].mxu0 %v1036
        %v1130 = vpop.f32.mrb[0].mxu0
        %v1131 = vadd.f32 0.0, %v1130
        %v1132 = vpop.f32.mrb[0].mxu0
        %v1133 = vpop.f32.mrb[0].mxu0
        %v1134 = vadd.f32 0.0, %v1133
        %v1135 = vpop.f32.mrb[0].mxu0
        %1136 = vmatprep.mubr.bf16.mxu0 0
        %1137 = vmatmul.mubr.bf16.gmra.mrb[0].mxu0 %v1039
        %v1138 = vpop.f32.mrb[0].mxu0
        %v1139 = vadd.f32 0.0, %v1138
        %v1140 = vpop.f32.mrb[0].mxu0
        %v1141 = vpop.f32.mrb[0].mxu0
        %v1142 = vadd.f32 0.0, %v1141
        %v1143 = vpop.f32.mrb[0].mxu0
        %1144 = vmatprep.mubr.bf16.mxu0 0
        %1145 = vmatmul.mubr.bf16.gmra.mrb[0].mxu0 %v1042
        %v1146 = vpop.f32.mrb[0].mxu0
        %v1147 = vadd.f32 0.0, %v1146
        %v1148 = vpop.f32.mrb[0].mxu0
        %v1149 = vpop.f32.mrb[0].mxu0
        %v1150 = vadd.f32 0.0, %v1149
        %v1151 = vpop.f32.mrb[0].mxu0
        %1152 = vmatprep.mubr.bf16.mxu0 0
        %1153 = vmatmul.mubr.bf16.gmra.mrb[0].mxu0 %v1045
        %v1154 = vpop.f32.mrb[0].mxu0
        %v1155 = vadd.f32 0.0, %v1154
        %v1156 = vpop.f32.mrb[0].mxu0
        %v1157 = vpop.f32.mrb[0].mxu0
        %v1158 = vadd.f32 0.0, %v1157
        %v1159 = vpop.f32.mrb[0].mxu0
        %1160 = vmatprep.mubr.bf16.mxu0 0
        %1161 = vmatmul.mubr.bf16.gmra.mrb[0].mxu0 %v1048
        %v1162 = vpop.f32.mrb[0].mxu0
        %v1163 = vadd.f32 0.0, %v1162
        %v1164 = vpop.f32.mrb[0].mxu0
        %v1165 = vpop.f32.mrb[0].mxu0
        %v1166 = vadd.f32 0.0, %v1165
        %v1167 = vpop.f32.mrb[0].mxu0
        %1168 = vmatprep.mubr.bf16.mxu0 0
        %1169 = vmatmul.mubr.bf16.gmra.mrb[0].mxu0 %v1051
        %v1170 = vpop.f32.mrb[0].mxu0
        %v1171 = vadd.f32 0.0, %v1170
        %v1172 = vpop.f32.mrb[0].mxu0
        %v1173 = vpop.f32.mrb[0].mxu0
        %v1174 = vadd.f32 0.0, %v1173
        %v1175 = vpop.f32.mrb[0].mxu0
        %1176 = vmatprep.mubr.bf16.mxu0 0
        %1177 = vmatmul.mubr.bf16.gmra.mrb[0].mxu0 %v1054
        %v1178 = vpop.f32.mrb[0].mxu0
        %v1179 = vadd.f32 0.0, %v1178
        %v1180 = vpop.f32.mrb[0].mxu0
        %v1181 = vpop.f32.mrb[0].mxu0
        %v1182 = vadd.f32 0.0, %v1181
        %v1183 = vpop.f32.mrb[0].mxu0
        %1184 = vmatprep.mubr.bf16.mxu0 0
        %1185 = vmatmul.mubr.bf16.gmra.mrb[0].mxu0 %v1057
        %v1186 = vpop.f32.mrb[0].mxu0
        %v1187 = vadd.f32 0.0, %v1186
        %v1188 = vpop.f32.mrb[0].mxu0
        %v1189 = vpop.f32.mrb[0].mxu0
        %v1190 = vadd.f32 0.0, %v1189
        %v1191 = vpop.f32.mrb[0].mxu0
        %1192 = vmatprep.mubr.bf16.mxu0 0
        %1193 = vmatmul.mubr.bf16.gmra.mrb[0].mxu0 %v1060
        %v1194 = vpop.f32.mrb[0].mxu0
        %v1195 = vadd.f32 0.0, %v1194
        %v1196 = vpop.f32.mrb[0].mxu0
        %v1197 = vpop.f32.mrb[0].mxu0
        %v1198 = vadd.f32 0.0, %v1197
        %v1199 = vpop.f32.mrb[0].mxu0
        %1200 = vmatprep.mubr.bf16.mxu0 0
        %1201 = vmatmul.mubr.bf16.gmra.mrb[0].mxu0 %v1063
        %v1202 = vpop.f32.mrb[0].mxu0
        %v1203 = vadd.f32 0.0, %v1202
        %v1204 = vpop.f32.mrb[0].mxu0
        %v1205 = vpop.f32.mrb[0].mxu0
        %v1206 = vadd.f32 0.0, %v1205
        %v1207 = vpop.f32.mrb[0].mxu0
        %1208 = vmatprep.mubr.bf16.mxu0 0
        %1209 = vmatmul.mubr.bf16.gmra.mrb[0].mxu0 %v1066
        %v1210 = vpop.f32.mrb[0].mxu0
        %v1211 = vadd.f32 0.0, %v1210
        %v1212 = vpop.f32.mrb[0].mxu0
        %v1213 = vpop.f32.mrb[0].mxu0
        %v1214 = vadd.f32 0.0, %v1213
        %v1215 = vpop.f32.mrb[0].mxu0
        %1216 = vmatprep.mubr.bf16.mxu0 0
        %1217 = vmatmul.mubr.bf16.gmra.mrb[0].mxu0 %v1069
        %v1218 = vpop.f32.mrb[0].mxu0
        %v1219 = vadd.f32 0.0, %v1218
        %v1220 = vpop.f32.mrb[0].mxu0
        %v1221 = vpop.f32.mrb[0].mxu0
        %v1222 = vadd.f32 0.0, %v1221
        %v1223 = vpop.f32.mrb[0].mxu0
        %1224 = vmatprep.mubr.bf16.mxu0 0
        %1225 = vmatmul.mubr.bf16.gmra.mrb[0].mxu0 %v1072
        %v1226 = vpop.f32.mrb[0].mxu0
        %v1227 = vadd.f32 0.0, %v1226
        %v1228 = vpop.f32.mrb[0].mxu0
        %v1229 = vpop.f32.mrb[0].mxu0
        %v1230 = vadd.f32 0.0, %v1229
        %v1231 = vpop.f32.mrb[0].mxu0
        %1232 = vmatprep.mubr.bf16.mxu0 0
        %1233 = vmatmul.mubr.bf16.gmra.mrb[0].mxu0 %v1075
        %v1234 = vpop.f32.mrb[0].mxu0
        %v1235 = vadd.f32 0.0, %v1234
        %v1236 = vpop.f32.mrb[0].mxu0
        %v1237 = vpop.f32.mrb[0].mxu0
        %v1238 = vadd.f32 0.0, %v1237
        %v1239 = vpop.f32.mrb[0].mxu0
        %1240 = vdwg.mxu0
        %v1241 = vadd.f32 %v777, %v1115
        %v1242 = vadd.f32 %v780, %v1118
        %v1243 = vadd.f32 %v785, %v1123
        %v1244 = vadd.f32 %v788, %v1126
        %v1245 = vadd.f32 %v793, %v1131
        %v1246 = vadd.f32 %v796, %v1134
        %v1247 = vadd.f32 %v801, %v1139
        %v1248 = vadd.f32 %v804, %v1142
        %v1249 = vadd.f32 %v809, %v1147
        %v1250 = vadd.f32 %v812, %v1150
        %v1251 = vadd.f32 %v817, %v1155
        %v1252 = vadd.f32 %v820, %v1158
        %v1253 = vadd.f32 %v825, %v1163
        %v1254 = vadd.f32 %v828, %v1166
        %v1255 = vadd.f32 %v833, %v1171
        %v1256 = vadd.f32 %v836, %v1174
        %v1257 = vadd.f32 %v841, %v1179
        %v1258 = vadd.f32 %v844, %v1182
        %v1259 = vadd.f32 %v849, %v1187
        %v1260 = vadd.f32 %v852, %v1190
        %v1261 = vadd.f32 %v857, %v1195
        %v1262 = vadd.f32 %v860, %v1198
        %v1263 = vadd.f32 %v865, %v1203
        %v1264 = vadd.f32 %v868, %v1206
        %v1265 = vadd.f32 %v873, %v1211
        %v1266 = vadd.f32 %v876, %v1214
        %v1267 = vadd.f32 %v881, %v1219
        %v1268 = vadd.f32 %v884, %v1222
        %v1269 = vadd.f32 %v889, %v1227
        %v1270 = vadd.f32 %v892, %v1230
        %v1271 = vadd.f32 %v897, %v1235
        %v1272 = vadd.f32 %v900, %v1238
        %v1274 = vlaneseq
        %v1275 = vshrl.u32 %v1274, 7
        %v1276 = vsub.s32 0, %v1275
        %v1277 = vrot.slane %v226, %v1276
        %v1279 = vadd.f32 %v1241, %v1277
        %v1280 = vadd.f32 %v1242, %v1277
        %v1281 = vadd.f32 %v1243, %v1277
        %v1282 = vadd.f32 %v1244, %v1277
        %v1283 = vadd.f32 %v1245, %v1277
        %v1284 = vadd.f32 %v1246, %v1277
        %v1285 = vadd.f32 %v1247, %v1277
        %v1286 = vadd.f32 %v1248, %v1277
        %v1287 = vadd.f32 %v1249, %v1277
        %v1288 = vadd.f32 %v1250, %v1277
        %v1289 = vadd.f32 %v1251, %v1277
        %v1290 = vadd.f32 %v1252, %v1277
        %v1291 = vadd.f32 %v1253, %v1277
        %v1292 = vadd.f32 %v1254, %v1277
        %v1293 = vadd.f32 %v1255, %v1277
        %v1294 = vadd.f32 %v1256, %v1277
        %v1295 = vadd.f32 %v1257, %v1277
        %v1296 = vadd.f32 %v1258, %v1277
        %v1297 = vadd.f32 %v1259, %v1277
        %v1298 = vadd.f32 %v1260, %v1277
        %v1299 = vadd.f32 %v1261, %v1277
        %v1300 = vadd.f32 %v1262, %v1277
        %v1301 = vadd.f32 %v1263, %v1277
        %v1302 = vadd.f32 %v1264, %v1277
        %v1303 = vadd.f32 %v1265, %v1277
        %v1304 = vadd.f32 %v1266, %v1277
        %v1305 = vadd.f32 %v1267, %v1277
        %v1306 = vadd.f32 %v1268, %v1277
        %v1307 = vadd.f32 %v1269, %v1277
        %v1308 = vadd.f32 %v1270, %v1277
        %v1309 = vadd.f32 %v1271, %v1277
        %v1310 = vadd.f32 %v1272, %v1277
        %v1311 = vmax.f32 %v1279, 0.0
        %v1312 = vmax.f32 %v1280, 0.0
        %v1313 = vmax.f32 %v1281, 0.0
        %v1314 = vmax.f32 %v1282, 0.0
        %v1315 = vmax.f32 %v1283, 0.0
        %v1316 = vmax.f32 %v1284, 0.0
        %v1317 = vmax.f32 %v1285, 0.0
        %v1318 = vmax.f32 %v1286, 0.0
        %v1319 = vmax.f32 %v1287, 0.0
        %v1320 = vmax.f32 %v1288, 0.0
        %v1321 = vmax.f32 %v1289, 0.0
        %v1322 = vmax.f32 %v1290, 0.0
        %v1323 = vmax.f32 %v1291, 0.0
        %v1324 = vmax.f32 %v1292, 0.0
        %v1325 = vmax.f32 %v1293, 0.0
        %v1326 = vmax.f32 %v1294, 0.0
        %v1327 = vmax.f32 %v1295, 0.0
        %v1328 = vmax.f32 %v1296, 0.0
        %v1329 = vmax.f32 %v1297, 0.0
        %v1330 = vmax.f32 %v1298, 0.0
        %v1331 = vmax.f32 %v1299, 0.0
        %v1332 = vmax.f32 %v1300, 0.0
        %v1333 = vmax.f32 %v1301, 0.0
        %v1334 = vmax.f32 %v1302, 0.0
        %v1335 = vmax.f32 %v1303, 0.0
        %v1336 = vmax.f32 %v1304, 0.0
        %v1337 = vmax.f32 %v1305, 0.0
        %v1338 = vmax.f32 %v1306, 0.0
        %v1339 = vmax.f32 %v1307, 0.0
        %v1340 = vmax.f32 %v1308, 0.0
        %v1341 = vmax.f32 %v1309, 0.0
        %v1342 = vmax.f32 %v1310, 0.0
        %1343 = vst [vmem:[%s210] sm:$0xff] %v1311
        %1344 = vst [vmem:[%s210 + $0x8] sm:$0xff] %v1312
        %1345 = vst [vmem:[%s210 + $0x10] sm:$0xff] %v1313
        %1346 = vst [vmem:[%s210 + $0x18] sm:$0xff] %v1314
        %1347 = vst [vmem:[%s210 + $0x20] sm:$0xff] %v1315
        %1348 = vst [vmem:[%s210 + $0x28] sm:$0xff] %v1316
        %1349 = vst [vmem:[%s210 + $0x30] sm:$0xff] %v1317
        %1350 = vst [vmem:[%s210 + $0x38] sm:$0xff] %v1318
        %1351 = vst [vmem:[%s210 + $0x40] sm:$0xff] %v1319
        %1352 = vst [vmem:[%s210 + $0x48] sm:$0xff] %v1320
        %1353 = vst [vmem:[%s210 + $0x50] sm:$0xff] %v1321
        %1354 = vst [vmem:[%s210 + $0x58] sm:$0xff] %v1322
        %1355 = vst [vmem:[%s210 + $0x60] sm:$0xff] %v1323
        %1356 = vst [vmem:[%s210 + $0x68] sm:$0xff] %v1324
        %1357 = vst [vmem:[%s210 + $0x70] sm:$0xff] %v1325
        %1358 = vst [vmem:[%s210 + $0x78] sm:$0xff] %v1326
        %1359 = vst [vmem:[%s210 + $0x80] sm:$0xff] %v1327
        %1360 = vst [vmem:[%s210 + $0x88] sm:$0xff] %v1328
        %1361 = vst [vmem:[%s210 + $0x90] sm:$0xff] %v1329
        %1362 = vst [vmem:[%s210 + $0x98] sm:$0xff] %v1330
        %1363 = vst [vmem:[%s210 + $0xa0] sm:$0xff] %v1331
        %1364 = vst [vmem:[%s210 + $0xa8] sm:$0xff] %v1332
        %1365 = vst [vmem:[%s210 + $0xb0] sm:$0xff] %v1333
        %1366 = vst [vmem:[%s210 + $0xb8] sm:$0xff] %v1334
        %1367 = vst [vmem:[%s210 + $0xc0] sm:$0xff] %v1335
        %1368 = vst [vmem:[%s210 + $0xc8] sm:$0xff] %v1336
        %1369 = vst [vmem:[%s210 + $0xd0] sm:$0xff] %v1337
        %1370 = vst [vmem:[%s210 + $0xd8] sm:$0xff] %v1338
        %1371 = vst [vmem:[%s210 + $0xe0] sm:$0xff] %v1339
        %1372 = vst [vmem:[%s210 + $0xe8] sm:$0xff] %v1340
        %1373 = vst [vmem:[%s210 + $0xf0] sm:$0xff] %v1341
        %1374 = vst [vmem:[%s210 + $0xf8] sm:$0xff] %v1342
        %s1375 = sand.u32 %s126, 1
        %s1376 = scalar_lea.sflag [#allocation3], %s1375
        %s1377 = sand.u32 %s126, 1
        %s1378 = smul.addr %s1377, 256
        %s1379 = scalar_lea.vmem [#allocation2], %s1378
        // Predicated region
        $region33: #{tpu_custom_call.1} parent=31 // pred_check
          %p1380 = pneg %p136
        $region34: #{tpu_custom_call.1} parent=31 // pred_check_branch
          %1382 = sbr.rel (%p1380) target = $region36
        $region35: #{tpu_custom_call.1} parent=31 // pred_region
          %s1383 = smul.u32 32, %s24
          %s1385 = ssub.s32 4096, 4096
          %1386 = vsyncadd %s1376, %s1385
          %s1387 = sadd.s32 %s23, %s1383
          %s1388 = smul.addr %s22, 32
          %s1389 = sadd.s32 %s1387, %s1388
          %s1390 = smul.addr %s1389, 128
          %s1391 = scalar_lea.hbm %s3, %s1390
          %s1392 = sshll.u32 %s1379, 4
          %s1393 = int_to_ptr.vmem [resolvable:$true] %s1392
          %1398 = dma.vmem_to_hbm [thread:$0]  %s1393, 4096, %s1391, %s1376, 128, 128, 8
        $region36: #{tpu_custom_call.1} parent=31 // pred_fallthru
          _
      $region32: #{tpu_custom_call.1} parent=5 // pred_fallthru
        _
      %p1399 = scmp.le.s32.totalorder 2, %s12
      // Predicated region
      $region37: #{tpu_custom_call.1} parent=5 // pred_check
        %p1400 = pneg %p1399
      $region38: #{tpu_custom_call.1} parent=5 // pred_check_branch
        %1402 = sbr.rel (%p1400) target = $region40
      $region39: #{tpu_custom_call.1} parent=5 // pred_region
        %s1403 = ssub.s32 %s12, 2
        // Predicated region
        $region41: #{tpu_custom_call.1} parent=39 // pred_check
          %p1404 = pneg %p142
        $region42: #{tpu_custom_call.1} parent=39 // pred_check_branch
          %1406 = sbr.rel (%p1404) target = $region44
        $region43: #{tpu_custom_call.1} parent=39 // pred_region
          %s1407 = sand.u32 %s127, 1
          %s1408 = scalar_lea.sflag [#allocation3], %s1407
          %s1409 = sand.u32 %s127, 1
          %s1410 = smul.addr %s1409, 256
          %s1411 = scalar_lea.vmem [#allocation2], %s1410
          %1412 = dma.done %s1408, 4096
        $region44: #{tpu_custom_call.1} parent=39 // pred_fallthru
          _
      $region40: #{tpu_custom_call.1} parent=5 // pred_fallthru
        _
    $region6: #{tpu_custom_call.1} parent=1 // loop_footer
      %s16 = sadd.s32 1, %s12
    $region7: #{tpu_custom_call.1} parent=1 // loop_footer_branch
      %11 = sbr.rel target = $region3
    $region8: #{tpu_custom_call.1} parent=1 // loop_exit
      _
    %1413 = vsyncpa [#allocation3], 1
    %s1414 = scalar_lea.sflag [#allocation3], 1
    %1415 = vsyncpa %s1414, 1

</llo_original>
